<compile_context>
chip_gen: v7x
topology: tpu7x:2x2x1
jax: 0.10.0
libtpu: 0.0.40
codegen_flags: <defaults>
</compile_context>

<pallas_src>
import functools

import jax
import jax.numpy as jnp
from jax import lax
from jax.experimental import pallas as pl
from jax.experimental.pallas import tpu as pltpu

FEATURE_DIM = 32
WIDTH = 128
DEPTH = 4
LN_EPS = 1e-5
_INV_SQRT2 = 0.7071067811865476  # hoisted 1/sqrt(2) for exact-erf GELU


@functools.lru_cache(maxsize=1)
def _tpu_caps():
    """Best-effort (cores_per_chip, has_bf16_vpu) from the device kind string.

    v7x has 2 TensorCores per chip and a bf16 VPU/EUP; v6e has 1 TC with bf16
    VPU/EUP; v5e has 1 TC and NO bf16 VPU/EUP.  Unknown chips -> conservative.
    """
    kind = ""
    try:
        kind = jax.devices()[0].device_kind.lower()
    except Exception:
        pass
    if "v7" in kind or "tpu7" in kind:
        return 2, True
    if "v6" in kind:
        return 1, True
    return 1, False


def _make_kernel(depth, has_ctx, elt_dtype):
    """Build the fused-MLP kernel body (whole network per row-tile)."""

    def _ln_gelu(h, gamma, beta):
        # LayerNorm statistics always in f32; E[h^2]-mu^2 keeps the two
        # cross-lane reductions independent (XLU slot overlaps VALU work).
        mu = jnp.mean(h, axis=-1, keepdims=True)
        var = jnp.mean(h * h, axis=-1, keepdims=True) - mu * mu
        hn = ((h - mu) * lax.rsqrt(var + LN_EPS)).astype(elt_dtype)
        hn = hn * gamma.astype(elt_dtype) + beta.astype(elt_dtype)
        # Exact-erf GELU (PyTorch nn.GELU default), in elt_dtype.
        return 0.5 * hn * (1.0 + lax.erf(hn * _INV_SQRT2))

    def kernel(*refs):
        if has_ctx:
            (x_ref, c_ref, w0x_ref, w0c_ref, wh_ref, wo_ref,
             vec_ref, bo_ref, out_ref) = refs
        else:
            (x_ref, w0x_ref, wh_ref, wo_ref,
             vec_ref, bo_ref, out_ref) = refs

        # Layer 0: split matmul fuses concat(x, context).  bf16 MXU, f32 acc.
        h = jnp.dot(x_ref[...].astype(jnp.bfloat16), w0x_ref[...],
                    preferred_element_type=jnp.float32)
        if has_ctx:
            h = h + jnp.dot(c_ref[...].astype(jnp.bfloat16), w0c_ref[...],
                            preferred_element_type=jnp.float32)
        a = _ln_gelu(h + vec_ref[0:1, :],
                     vec_ref[depth:depth + 1, :],
                     vec_ref[2 * depth:2 * depth + 1, :])
        # Dropout -> identity (eval mode).

        # Hidden layers 1..depth-1 (weights stacked along leading axis).
        for i in range(1, depth):
            h = jnp.dot(a.astype(jnp.bfloat16), wh_ref[i - 1],
                        preferred_element_type=jnp.float32)
            a = _ln_gelu(h + vec_ref[i:i + 1, :],
                         vec_ref[depth + i:depth + i + 1, :],
                         vec_ref[2 * depth + i:2 * depth + i + 1, :])

        # Output projection (32 lanes; lane-sparse store is second-order here).
        out_ref[...] = (jnp.dot(a.astype(jnp.bfloat16), wo_ref[...],
                                preferred_element_type=jnp.float32)
                        + bo_ref[...]).astype(out_ref.dtype)

    return kernel


def init_params(key, input_dim, feature_dim=FEATURE_DIM, depth=DEPTH, width=WIDTH):
    """Deterministic synthetic init matching the torch module's shapes.

    Packed layout (few refs -> few DMA descriptors / buffer pairs):
      w0    : (input_dim, width)        bf16   first Linear weight
      wh    : (depth-1, width, width)   bf16   hidden Linear weights
      w_out : (width, feature_dim)      bf16   output Linear weight
      vecs  : (3*depth, width)          f32    rows [0:d]=bias, [d:2d]=gamma, [2d:3d]=beta
      b_out : (1, feature_dim)          f32    output Linear bias
    """
    key, k1, k2 = jax.random.split(key, 3)
    w0 = (jax.random.normal(k1, (input_dim, width), jnp.float32)
          * (1.0 / jnp.sqrt(input_dim)))
    biases = [jax.random.normal(k2, (width,), jnp.float32) * 0.01]
    wh = []
    for _ in range(depth - 1):
        key, k1, k2 = jax.random.split(key, 3)
        wh.append(jax.random.normal(k1, (width, width), jnp.float32)
                  * (1.0 / jnp.sqrt(width)))
        biases.append(jax.random.normal(k2, (width,), jnp.float32) * 0.01)
    key, k1, k2 = jax.random.split(key, 3)
    w_out = (jax.random.normal(k1, (width, feature_dim), jnp.float32)
             * (1.0 / jnp.sqrt(width)))
    b_out = jax.random.normal(k2, (1, feature_dim), jnp.float32) * 0.01
    vecs = jnp.concatenate(
        [jnp.stack(biases, axis=0),
         jnp.ones((depth, width), jnp.float32),     # LayerNorm gamma
         jnp.zeros((depth, width), jnp.float32)],   # LayerNorm beta
        axis=0)
    return {
        "w0": w0.astype(jnp.bfloat16),
        "wh": jnp.stack(wh, axis=0).astype(jnp.bfloat16),
        "w_out": w_out.astype(jnp.bfloat16),
        "vecs": vecs,
        "b_out": b_out,
    }


def _round_up8(n):
    return max(8, ((n + 7) // 8) * 8)


def _choose_tile_rows(n_rows, num_cores, max_tile=2048):
    """Core-count-aware row tile (multiple of 8).

    2-TC chips (v7x): ceil-half rounded UP so medium N gives 2 near-even tiles
    (e.g. 1000 -> 504/496, not 496/496/8) and both TensorCores stay busy.
    1-TC chips (v5e/v6e): the grid is a serial loop, so don't split small /
    medium N at all; just cap the tile (bigger tiles amortize the ~0.35 us per
    grid step; VMEM is nowhere near the limit at 2048 rows).
    """
    if num_cores >= 2 and n_rows > 8:
        return min(max_tile, _round_up8(pl.cdiv(n_rows, 2)))
    return min(max_tile, _round_up8(n_rows))


def _build_call(x2, ctx2, w0, wh, w_out, vecs, b_out, tile_rows, depth, bf16_elt):
    n_rows, obs_dim = x2.shape
    feat = w_out.shape[-1]
    has_ctx = ctx2 is not None
    grid = (pl.cdiv(n_rows, tile_rows),)
    elt_dtype = jnp.bfloat16 if bf16_elt else jnp.float32

    w0x = w0[:obs_dim]
    inputs = [x2]
    in_specs = [pl.BlockSpec((tile_rows, obs_dim), lambda i: (i, 0))]
    weight_inputs = [w0x]
    weight_specs = [pl.BlockSpec(w0x.shape, lambda i: (0, 0))]
    if has_ctx:
        ctx_dim = ctx2.shape[-1]
        w0c = w0[obs_dim:]
        inputs.append(ctx2)
        in_specs.append(pl.BlockSpec((tile_rows, ctx_dim), lambda i: (i, 0)))
        weight_inputs.append(w0c)
        weight_specs.append(pl.BlockSpec(w0c.shape, lambda i: (0, 0)))

    weight_inputs += [wh, w_out, vecs, b_out]
    weight_specs += [
        pl.BlockSpec(wh.shape, lambda i: (0, 0, 0)),
        pl.BlockSpec(w_out.shape, lambda i: (0, 0)),
        pl.BlockSpec(vecs.shape, lambda i: (0, 0)),
        pl.BlockSpec(b_out.shape, lambda i: (0, 0)),
    ]

    kernel = _make_kernel(depth, has_ctx, elt_dtype)
    return pl.pallas_call(
        kernel,
        out_shape=jax.ShapeDtypeStruct((n_rows, feat), jnp.float32),
        grid_spec=pltpu.PrefetchScalarGridSpec(
            num_scalar_prefetch=0,
            grid=grid,
            in_specs=in_specs + weight_specs,
            out_specs=pl.BlockSpec((tile_rows, feat), lambda i: (i, 0)),
        ),
        compiler_params=pltpu.CompilerParams(
            dimension_semantics=("parallel",)),
    )(*inputs, *weight_inputs)


@functools.partial(jax.jit, static_argnames=("tile_rows", "depth", "bf16_elt"))
def _forward_ctx(x2, ctx2, w0, wh, w_out, vecs, b_out, tile_rows, depth, bf16_elt):
    return _build_call(x2, ctx2, w0, wh, w_out, vecs, b_out,
                       tile_rows, depth, bf16_elt)


@functools.partial(jax.jit, static_argnames=("tile_rows", "depth", "bf16_elt"))
def _forward_noctx(x2, w0, wh, w_out, vecs, b_out, tile_rows, depth, bf16_elt):
    return _build_call(x2, None, w0, wh, w_out, vecs, b_out,
                       tile_rows, depth, bf16_elt)


def shared_feature_extractor(x, params, context=None, tile_rows=None,
                             bf16_elementwise=None):
    """Forward pass. x: (..., obs_dim); context: optional (..., ctx_dim).

    Inputs stream in their native dtype (no wrapper-side f32 copy); they are
    cast to bf16 inside the kernel only for the MXU operands.
    """
    lead_shape = x.shape[:-1]
    x2 = x.reshape(-1, x.shape[-1])
    n_rows = x2.shape[0]
    depth = params["vecs"].shape[0] // 3
    num_cores, has_bf16_vpu = _tpu_caps()
    if tile_rows is None:
        tile_rows = _choose_tile_rows(n_rows, num_cores)
    if bf16_elementwise is None:
        bf16_elementwise = has_bf16_vpu
    if context is not None:
        c2 = context.reshape(-1, context.shape[-1])
        out = _forward_ctx(x2, c2, params["w0"], params["wh"], params["w_out"],
                           params["vecs"], params["b_out"],
                           tile_rows=tile_rows, depth=depth,
                           bf16_elt=bool(bf16_elementwise))
    else:
        out = _forward_noctx(x2, params["w0"], params["wh"], params["w_out"],
                             params["vecs"], params["b_out"],
                             tile_rows=tile_rows, depth=depth,
                             bf16_elt=bool(bf16_elementwise))
    return out.reshape(lead_shape + (out.shape[-1],))


def _reference(x, context, params):
    """Pure-JAX f32 reference (same bf16-quantized weight values)."""
    if context is not None:
        x = jnp.concatenate([x, context], axis=-1)
    depth = params["vecs"].shape[0] // 3
    w0 = params["w0"].astype(jnp.float32)
    wh = params["wh"].astype(jnp.float32)
    w_out = params["w_out"].astype(jnp.float32)
    vecs = params["vecs"]
    ws = [w0] + [wh[i] for i in range(depth - 1)]
    h = x.astype(jnp.float32)
    for i in range(depth):
        h = h @ ws[i] + vecs[i]
        mu = jnp.mean(h, axis=-1, keepdims=True)
        var = jnp.mean((h - mu) ** 2, axis=-1, keepdims=True)
        h = (h - mu) / jnp.sqrt(var + LN_EPS) * vecs[depth + i] + vecs[2 * depth + i]
        h = jax.nn.gelu(h, approximate=False)
    return h @ w_out + params["b_out"]


def _run(x, params, context=None, tile_rows=None):
    """Run the kernel; if the bf16-elementwise variant fails to lower on this
    chip, fall back to the f32-elementwise path (lowers on every TPU gen)."""
    try:
        return jax.block_until_ready(
            shared_feature_extractor(x, params, context, tile_rows=tile_rows))
    except Exception:
        return jax.block_until_ready(
            shared_feature_extractor(x, params, context, tile_rows=tile_rows,
                                     bf16_elementwise=False))


if __name__ == "__main__":
    key = jax.random.PRNGKey(0)
    kx, kc, kp = jax.random.split(key, 3)

    batch, seq = 2, 8
    obs_dim, ctx_dim = 24, 8          # concatenated -> input_dim = 32
    input_dim = obs_dim + ctx_dim

    x = jax.random.normal(kx, (batch, seq, obs_dim), jnp.float32)
    context = jax.random.normal(kc, (batch, seq, ctx_dim), jnp.float32)
    params = init_params(kp, input_dim)

    # Tolerance note: the kernel quantizes matmul operands (and, on v6e/v7x,
    # the LN/GELU elementwise chain) to bf16, while the reference is pure f32.
    ATOL, RTOL = 7.5e-2, 5e-2

    out = _run(x, params, context)
    ref = _reference(x, context, params)
    assert out.shape == (batch, seq, FEATURE_DIM), out.shape
    err = float(jnp.max(jnp.abs(out - ref)))
    assert jnp.allclose(out, ref, atol=ATOL, rtol=RTOL), err

    # No-context path + n_rows not a multiple of tile_rows (masked edge block).
    x_odd = jax.random.normal(kc, (13, input_dim), jnp.float32)
    out2 = _run(x_odd, params, tile_rows=8)
    ref2 = _reference(x_odd, None, params)
    assert out2.shape == (13, FEATURE_DIM), out2.shape
    err2 = float(jnp.max(jnp.abs(out2 - ref2)))
    assert jnp.allclose(out2, ref2, atol=ATOL, rtol=RTOL), err2

    print("KERNEL_OK")
</pallas_src>

<mosaic_0001>
module attributes {stable_mosaic.version = 11 : i64} {
  func.func @kernel(%arg0: i32, %arg1: memref<16x24xf32, #tpu.memory_space<vmem>>, %arg2: memref<16x8xf32, #tpu.memory_space<vmem>>, %arg3: memref<24x128xbf16, #tpu.memory_space<vmem>>, %arg4: memref<8x128xbf16, #tpu.memory_space<vmem>>, %arg5: memref<3x128x128xbf16, #tpu.memory_space<vmem>>, %arg6: memref<128x32xbf16, #tpu.memory_space<vmem>>, %arg7: memref<12x128xf32, #tpu.memory_space<vmem>>, %arg8: memref<1x32xf32, #tpu.memory_space<vmem>>, %arg9: memref<16x32xf32, #tpu.memory_space<vmem>>) attributes {dimension_semantics = [#tpu.dimension_semantics<parallel>], iteration_bounds = array<i64: 1>, scalar_prefetch = 0 : i64, scratch_operands = 0 : i64, tpu.core_type = #tpu.core_type<tc>, window_params = [{transform_indices = @transform_0, window_bounds = array<i64: 16, 24>}, {transform_indices = @transform_1, window_bounds = array<i64: 16, 8>}, {pipeline_mode = #tpu.pipeline_mode<synchronous>, transform_indices = @transform_2, window_bounds = array<i64: 24, 128>}, {pipeline_mode = #tpu.pipeline_mode<synchronous>, transform_indices = @transform_3, window_bounds = array<i64: 8, 128>}, {pipeline_mode = #tpu.pipeline_mode<synchronous>, transform_indices = @transform_4, window_bounds = array<i64: 3, 128, 128>}, {pipeline_mode = #tpu.pipeline_mode<synchronous>, transform_indices = @transform_5, window_bounds = array<i64: 128, 32>}, {pipeline_mode = #tpu.pipeline_mode<synchronous>, transform_indices = @transform_6, window_bounds = array<i64: 12, 128>}, {pipeline_mode = #tpu.pipeline_mode<synchronous>, transform_indices = @transform_7, window_bounds = array<i64: 1, 32>}, {transform_indices = @transform_8, window_bounds = array<i64: 16, 32>}]} {
    %c0 = arith.constant 0 : index
    %c0_0 = arith.constant 0 : index
    %0 = vector.load %arg1[%c0, %c0_0] : memref<16x24xf32, #tpu.memory_space<vmem>>, vector<16x24xf32>
    %1 = arith.truncf %0 : vector<16x24xf32> to vector<16x24xbf16>
    %c0_1 = arith.constant 0 : index
    %c0_2 = arith.constant 0 : index
    %2 = vector.load %arg3[%c0_1, %c0_2] : memref<24x128xbf16, #tpu.memory_space<vmem>>, vector<24x128xbf16>
    %cst = arith.constant dense<0.000000e+00> : vector<16x128xf32>
    %3 = tpu.matmul %1, %2, %cst {dimension_numbers = #tpu.dot_dimension_numbers<[1], [0], [0], [1], [0, 0, 1, 1], [], []>} : vector<16x24xbf16>, vector<24x128xbf16>, vector<16x128xf32> -> vector<16x128xf32>
    %c0_3 = arith.constant 0 : index
    %c0_4 = arith.constant 0 : index
    %4 = vector.load %arg2[%c0_3, %c0_4] : memref<16x8xf32, #tpu.memory_space<vmem>>, vector<16x8xf32>
    %5 = arith.truncf %4 : vector<16x8xf32> to vector<16x8xbf16>
    %c0_5 = arith.constant 0 : index
    %c0_6 = arith.constant 0 : index
    %6 = vector.load %arg4[%c0_5, %c0_6] : memref<8x128xbf16, #tpu.memory_space<vmem>>, vector<8x128xbf16>
    %cst_7 = arith.constant dense<0.000000e+00> : vector<16x128xf32>
    %7 = tpu.matmul %5, %6, %cst_7 {dimension_numbers = #tpu.dot_dimension_numbers<[1], [0], [0], [1], [0, 0, 1, 1], [], []>} : vector<16x8xbf16>, vector<8x128xbf16>, vector<16x128xf32> -> vector<16x128xf32>
    %8 = arith.addf %3, %7 : vector<16x128xf32>
    %c0_8 = arith.constant 0 : index
    %c0_9 = arith.constant 0 : index
    %9 = vector.load %arg7[%c0_8, %c0_9] : memref<12x128xf32, #tpu.memory_space<vmem>>, vector<1x128xf32>
    %10 = vector.broadcast %9 : vector<1x128xf32> to vector<16x128xf32>
    %11 = arith.addf %8, %10 : vector<16x128xf32>
    %c4 = arith.constant 4 : index
    %c0_10 = arith.constant 0 : index
    %12 = vector.load %arg7[%c4, %c0_10] : memref<12x128xf32, #tpu.memory_space<vmem>>, vector<1x128xf32>
    %c8 = arith.constant 8 : index
    %c0_11 = arith.constant 0 : index
    %13 = vector.load %arg7[%c8, %c0_11] : memref<12x128xf32, #tpu.memory_space<vmem>>, vector<1x128xf32>
    %cst_12 = arith.constant dense<0.000000e+00> : vector<16xf32>
    %14 = vector.multi_reduction <add>, %11, %cst_12 [1] : vector<16x128xf32> to vector<16xf32>
    %15 = vector.shape_cast %14 : vector<16xf32> to vector<16x1xf32>
    %cst_13 = arith.constant 1.280000e+02 : f32
    %16 = vector.broadcast %cst_13 : f32 to vector<16x1xf32>
    %17 = arith.divf %15, %16 : vector<16x1xf32>
    %18 = arith.mulf %11, %11 : vector<16x128xf32>
    %cst_14 = arith.constant dense<0.000000e+00> : vector<16xf32>
    %19 = vector.multi_reduction <add>, %18, %cst_14 [1] : vector<16x128xf32> to vector<16xf32>
    %20 = vector.shape_cast %19 : vector<16xf32> to vector<16x1xf32>
    %cst_15 = arith.constant 1.280000e+02 : f32
    %21 = vector.broadcast %cst_15 : f32 to vector<16x1xf32>
    %22 = arith.divf %20, %21 : vector<16x1xf32>
    %23 = arith.mulf %17, %17 : vector<16x1xf32>
    %24 = arith.subf %22, %23 : vector<16x1xf32>
    %25 = vector.broadcast %17 : vector<16x1xf32> to vector<16x128xf32>
    %26 = arith.subf %11, %25 : vector<16x128xf32>
    %cst_16 = arith.constant 9.99999974E-6 : f32
    %27 = vector.broadcast %cst_16 : f32 to vector<16x1xf32>
    %28 = arith.addf %24, %27 : vector<16x1xf32>
    %29 = math.rsqrt %28 : vector<16x1xf32>
    %30 = vector.broadcast %29 : vector<16x1xf32> to vector<16x128xf32>
    %31 = arith.mulf %26, %30 : vector<16x128xf32>
    %32 = vector.broadcast %12 : vector<1x128xf32> to vector<16x128xf32>
    %33 = arith.mulf %31, %32 : vector<16x128xf32>
    %34 = vector.broadcast %13 : vector<1x128xf32> to vector<16x128xf32>
    %35 = arith.addf %33, %34 : vector<16x128xf32>
    %cst_17 = arith.constant 5.000000e-01 : f32
    %36 = vector.broadcast %cst_17 : f32 to vector<16x128xf32>
    %37 = arith.mulf %36, %35 : vector<16x128xf32>
    %cst_18 = arith.constant 0.707106769 : f32
    %38 = vector.broadcast %cst_18 : f32 to vector<16x128xf32>
    %39 = arith.mulf %35, %38 : vector<16x128xf32>
    %40 = math.erf %39 : vector<16x128xf32>
    %cst_19 = arith.constant 1.000000e+00 : f32
    %41 = vector.broadcast %cst_19 : f32 to vector<16x128xf32>
    %42 = arith.addf %41, %40 : vector<16x128xf32>
    %43 = arith.mulf %37, %42 : vector<16x128xf32>
    %44 = arith.truncf %43 : vector<16x128xf32> to vector<16x128xbf16>
    %c0_20 = arith.constant 0 : index
    %c0_21 = arith.constant 0 : index
    %c0_22 = arith.constant 0 : index
    %45 = vector.load %arg5[%c0_20, %c0_21, %c0_22] : memref<3x128x128xbf16, #tpu.memory_space<vmem>>, vector<1x128x128xbf16>
    %46 = vector.shape_cast %45 : vector<1x128x128xbf16> to vector<128x128xbf16>
    %cst_23 = arith.constant dense<0.000000e+00> : vector<16x128xf32>
    %47 = tpu.matmul %44, %46, %cst_23 {dimension_numbers = #tpu.dot_dimension_numbers<[1], [0], [0], [1], [0, 0, 1, 1], [], []>} : vector<16x128xbf16>, vector<128x128xbf16>, vector<16x128xf32> -> vector<16x128xf32>
    %c1 = arith.constant 1 : index
    %c0_24 = arith.constant 0 : index
    %48 = vector.load %arg7[%c1, %c0_24] : memref<12x128xf32, #tpu.memory_space<vmem>>, vector<1x128xf32>
    %49 = vector.broadcast %48 : vector<1x128xf32> to vector<16x128xf32>
    %50 = arith.addf %47, %49 : vector<16x128xf32>
    %c5 = arith.constant 5 : index
    %c0_25 = arith.constant 0 : index
    %51 = vector.load %arg7[%c5, %c0_25] : memref<12x128xf32, #tpu.memory_space<vmem>>, vector<1x128xf32>
    %c9 = arith.constant 9 : index
    %c0_26 = arith.constant 0 : index
    %52 = vector.load %arg7[%c9, %c0_26] : memref<12x128xf32, #tpu.memory_space<vmem>>, vector<1x128xf32>
    %cst_27 = arith.constant dense<0.000000e+00> : vector<16xf32>
    %53 = vector.multi_reduction <add>, %50, %cst_27 [1] : vector<16x128xf32> to vector<16xf32>
    %54 = vector.shape_cast %53 : vector<16xf32> to vector<16x1xf32>
    %cst_28 = arith.constant 1.280000e+02 : f32
    %55 = vector.broadcast %cst_28 : f32 to vector<16x1xf32>
    %56 = arith.divf %54, %55 : vector<16x1xf32>
    %57 = arith.mulf %50, %50 : vector<16x128xf32>
    %cst_29 = arith.constant dense<0.000000e+00> : vector<16xf32>
    %58 = vector.multi_reduction <add>, %57, %cst_29 [1] : vector<16x128xf32> to vector<16xf32>
    %59 = vector.shape_cast %58 : vector<16xf32> to vector<16x1xf32>
    %cst_30 = arith.constant 1.280000e+02 : f32
    %60 = vector.broadcast %cst_30 : f32 to vector<16x1xf32>
    %61 = arith.divf %59, %60 : vector<16x1xf32>
    %62 = arith.mulf %56, %56 : vector<16x1xf32>
    %63 = arith.subf %61, %62 : vector<16x1xf32>
    %64 = vector.broadcast %56 : vector<16x1xf32> to vector<16x128xf32>
    %65 = arith.subf %50, %64 : vector<16x128xf32>
    %cst_31 = arith.constant 9.99999974E-6 : f32
    %66 = vector.broadcast %cst_31 : f32 to vector<16x1xf32>
    %67 = arith.addf %63, %66 : vector<16x1xf32>
    %68 = math.rsqrt %67 : vector<16x1xf32>
    %69 = vector.broadcast %68 : vector<16x1xf32> to vector<16x128xf32>
    %70 = arith.mulf %65, %69 : vector<16x128xf32>
    %71 = vector.broadcast %51 : vector<1x128xf32> to vector<16x128xf32>
    %72 = arith.mulf %70, %71 : vector<16x128xf32>
    %73 = vector.broadcast %52 : vector<1x128xf32> to vector<16x128xf32>
    %74 = arith.addf %72, %73 : vector<16x128xf32>
    %cst_32 = arith.constant 5.000000e-01 : f32
    %75 = vector.broadcast %cst_32 : f32 to vector<16x128xf32>
    %76 = arith.mulf %75, %74 : vector<16x128xf32>
    %cst_33 = arith.constant 0.707106769 : f32
    %77 = vector.broadcast %cst_33 : f32 to vector<16x128xf32>
    %78 = arith.mulf %74, %77 : vector<16x128xf32>
    %79 = math.erf %78 : vector<16x128xf32>
    %cst_34 = arith.constant 1.000000e+00 : f32
    %80 = vector.broadcast %cst_34 : f32 to vector<16x128xf32>
    %81 = arith.addf %80, %79 : vector<16x128xf32>
    %82 = arith.mulf %76, %81 : vector<16x128xf32>
    %83 = arith.truncf %82 : vector<16x128xf32> to vector<16x128xbf16>
    %c1_35 = arith.constant 1 : index
    %c0_36 = arith.constant 0 : index
    %c0_37 = arith.constant 0 : index
    %84 = vector.load %arg5[%c1_35, %c0_36, %c0_37] : memref<3x128x128xbf16, #tpu.memory_space<vmem>>, vector<1x128x128xbf16>
    %85 = vector.shape_cast %84 : vector<1x128x128xbf16> to vector<128x128xbf16>
    %cst_38 = arith.constant dense<0.000000e+00> : vector<16x128xf32>
    %86 = tpu.matmul %83, %85, %cst_38 {dimension_numbers = #tpu.dot_dimension_numbers<[1], [0], [0], [1], [0, 0, 1, 1], [], []>} : vector<16x128xbf16>, vector<128x128xbf16>, vector<16x128xf32> -> vector<16x128xf32>
    %c2 = arith.constant 2 : index
    %c0_39 = arith.constant 0 : index
    %87 = vector.load %arg7[%c2, %c0_39] : memref<12x128xf32, #tpu.memory_space<vmem>>, vector<1x128xf32>
    %88 = vector.broadcast %87 : vector<1x128xf32> to vector<16x128xf32>
    %89 = arith.addf %86, %88 : vector<16x128xf32>
    %c6 = arith.constant 6 : index
    %c0_40 = arith.constant 0 : index
    %90 = vector.load %arg7[%c6, %c0_40] : memref<12x128xf32, #tpu.memory_space<vmem>>, vector<1x128xf32>
    %c10 = arith.constant 10 : index
    %c0_41 = arith.constant 0 : index
    %91 = vector.load %arg7[%c10, %c0_41] : memref<12x128xf32, #tpu.memory_space<vmem>>, vector<1x128xf32>
    %cst_42 = arith.constant dense<0.000000e+00> : vector<16xf32>
    %92 = vector.multi_reduction <add>, %89, %cst_42 [1] : vector<16x128xf32> to vector<16xf32>
    %93 = vector.shape_cast %92 : vector<16xf32> to vector<16x1xf32>
    %cst_43 = arith.constant 1.280000e+02 : f32
    %94 = vector.broadcast %cst_43 : f32 to vector<16x1xf32>
    %95 = arith.divf %93, %94 : vector<16x1xf32>
    %96 = arith.mulf %89, %89 : vector<16x128xf32>
    %cst_44 = arith.constant dense<0.000000e+00> : vector<16xf32>
    %97 = vector.multi_reduction <add>, %96, %cst_44 [1] : vector<16x128xf32> to vector<16xf32>
    %98 = vector.shape_cast %97 : vector<16xf32> to vector<16x1xf32>
    %cst_45 = arith.constant 1.280000e+02 : f32
    %99 = vector.broadcast %cst_45 : f32 to vector<16x1xf32>
    %100 = arith.divf %98, %99 : vector<16x1xf32>
    %101 = arith.mulf %95, %95 : vector<16x1xf32>
    %102 = arith.subf %100, %101 : vector<16x1xf32>
    %103 = vector.broadcast %95 : vector<16x1xf32> to vector<16x128xf32>
    %104 = arith.subf %89, %103 : vector<16x128xf32>
    %cst_46 = arith.constant 9.99999974E-6 : f32
    %105 = vector.broadcast %cst_46 : f32 to vector<16x1xf32>
    %106 = arith.addf %102, %105 : vector<16x1xf32>
    %107 = math.rsqrt %106 : vector<16x1xf32>
    %108 = vector.broadcast %107 : vector<16x1xf32> to vector<16x128xf32>
    %109 = arith.mulf %104, %108 : vector<16x128xf32>
    %110 = vector.broadcast %90 : vector<1x128xf32> to vector<16x128xf32>
    %111 = arith.mulf %109, %110 : vector<16x128xf32>
    %112 = vector.broadcast %91 : vector<1x128xf32> to vector<16x128xf32>
    %113 = arith.addf %111, %112 : vector<16x128xf32>
    %cst_47 = arith.constant 5.000000e-01 : f32
    %114 = vector.broadcast %cst_47 : f32 to vector<16x128xf32>
    %115 = arith.mulf %114, %113 : vector<16x128xf32>
    %cst_48 = arith.constant 0.707106769 : f32
    %116 = vector.broadcast %cst_48 : f32 to vector<16x128xf32>
    %117 = arith.mulf %113, %116 : vector<16x128xf32>
    %118 = math.erf %117 : vector<16x128xf32>
    %cst_49 = arith.constant 1.000000e+00 : f32
    %119 = vector.broadcast %cst_49 : f32 to vector<16x128xf32>
    %120 = arith.addf %119, %118 : vector<16x128xf32>
    %121 = arith.mulf %115, %120 : vector<16x128xf32>
    %122 = arith.truncf %121 : vector<16x128xf32> to vector<16x128xbf16>
    %c2_50 = arith.constant 2 : index
    %c0_51 = arith.constant 0 : index
    %c0_52 = arith.constant 0 : index
    %123 = vector.load %arg5[%c2_50, %c0_51, %c0_52] : memref<3x128x128xbf16, #tpu.memory_space<vmem>>, vector<1x128x128xbf16>
    %124 = vector.shape_cast %123 : vector<1x128x128xbf16> to vector<128x128xbf16>
    %cst_53 = arith.constant dense<0.000000e+00> : vector<16x128xf32>
    %125 = tpu.matmul %122, %124, %cst_53 {dimension_numbers = #tpu.dot_dimension_numbers<[1], [0], [0], [1], [0, 0, 1, 1], [], []>} : vector<16x128xbf16>, vector<128x128xbf16>, vector<16x128xf32> -> vector<16x128xf32>
    %c3 = arith.constant 3 : index
    %c0_54 = arith.constant 0 : index
    %126 = vector.load %arg7[%c3, %c0_54] : memref<12x128xf32, #tpu.memory_space<vmem>>, vector<1x128xf32>
    %127 = vector.broadcast %126 : vector<1x128xf32> to vector<16x128xf32>
    %128 = arith.addf %125, %127 : vector<16x128xf32>
    %c7 = arith.constant 7 : index
    %c0_55 = arith.constant 0 : index
    %129 = vector.load %arg7[%c7, %c0_55] : memref<12x128xf32, #tpu.memory_space<vmem>>, vector<1x128xf32>
    %c11 = arith.constant 11 : index
    %c0_56 = arith.constant 0 : index
    %130 = vector.load %arg7[%c11, %c0_56] : memref<12x128xf32, #tpu.memory_space<vmem>>, vector<1x128xf32>
    %cst_57 = arith.constant dense<0.000000e+00> : vector<16xf32>
    %131 = vector.multi_reduction <add>, %128, %cst_57 [1] : vector<16x128xf32> to vector<16xf32>
    %132 = vector.shape_cast %131 : vector<16xf32> to vector<16x1xf32>
    %cst_58 = arith.constant 1.280000e+02 : f32
    %133 = vector.broadcast %cst_58 : f32 to vector<16x1xf32>
    %134 = arith.divf %132, %133 : vector<16x1xf32>
    %135 = arith.mulf %128, %128 : vector<16x128xf32>
    %cst_59 = arith.constant dense<0.000000e+00> : vector<16xf32>
    %136 = vector.multi_reduction <add>, %135, %cst_59 [1] : vector<16x128xf32> to vector<16xf32>
    %137 = vector.shape_cast %136 : vector<16xf32> to vector<16x1xf32>
    %cst_60 = arith.constant 1.280000e+02 : f32
    %138 = vector.broadcast %cst_60 : f32 to vector<16x1xf32>
    %139 = arith.divf %137, %138 : vector<16x1xf32>
    %140 = arith.mulf %134, %134 : vector<16x1xf32>
    %141 = arith.subf %139, %140 : vector<16x1xf32>
    %142 = vector.broadcast %134 : vector<16x1xf32> to vector<16x128xf32>
    %143 = arith.subf %128, %142 : vector<16x128xf32>
    %cst_61 = arith.constant 9.99999974E-6 : f32
    %144 = vector.broadcast %cst_61 : f32 to vector<16x1xf32>
    %145 = arith.addf %141, %144 : vector<16x1xf32>
    %146 = math.rsqrt %145 : vector<16x1xf32>
    %147 = vector.broadcast %146 : vector<16x1xf32> to vector<16x128xf32>
    %148 = arith.mulf %143, %147 : vector<16x128xf32>
    %149 = vector.broadcast %129 : vector<1x128xf32> to vector<16x128xf32>
    %150 = arith.mulf %148, %149 : vector<16x128xf32>
    %151 = vector.broadcast %130 : vector<1x128xf32> to vector<16x128xf32>
    %152 = arith.addf %150, %151 : vector<16x128xf32>
    %cst_62 = arith.constant 5.000000e-01 : f32
    %153 = vector.broadcast %cst_62 : f32 to vector<16x128xf32>
    %154 = arith.mulf %153, %152 : vector<16x128xf32>
    %cst_63 = arith.constant 0.707106769 : f32
    %155 = vector.broadcast %cst_63 : f32 to vector<16x128xf32>
    %156 = arith.mulf %152, %155 : vector<16x128xf32>
    %157 = math.erf %156 : vector<16x128xf32>
    %cst_64 = arith.constant 1.000000e+00 : f32
    %158 = vector.broadcast %cst_64 : f32 to vector<16x128xf32>
    %159 = arith.addf %158, %157 : vector<16x128xf32>
    %160 = arith.mulf %154, %159 : vector<16x128xf32>
    %161 = arith.truncf %160 : vector<16x128xf32> to vector<16x128xbf16>
    %c0_65 = arith.constant 0 : index
    %c0_66 = arith.constant 0 : index
    %162 = vector.load %arg6[%c0_65, %c0_66] : memref<128x32xbf16, #tpu.memory_space<vmem>>, vector<128x32xbf16>
    %cst_67 = arith.constant dense<0.000000e+00> : vector<16x32xf32>
    %163 = tpu.matmul %161, %162, %cst_67 {dimension_numbers = #tpu.dot_dimension_numbers<[1], [0], [0], [1], [0, 0, 1, 1], [], []>} : vector<16x128xbf16>, vector<128x32xbf16>, vector<16x32xf32> -> vector<16x32xf32>
    %c0_68 = arith.constant 0 : index
    %c0_69 = arith.constant 0 : index
    %164 = vector.load %arg8[%c0_68, %c0_69] : memref<1x32xf32, #tpu.memory_space<vmem>>, vector<1x32xf32>
    %165 = vector.broadcast %164 : vector<1x32xf32> to vector<16x32xf32>
    %166 = arith.addf %163, %165 : vector<16x32xf32>
    %c0_70 = arith.constant 0 : index
    %c0_71 = arith.constant 0 : index
    %167 = vector.load %arg9[%c0_70, %c0_71] : memref<16x32xf32, #tpu.memory_space<vmem>>, vector<16x32xf32>
    tpu.vector_store %arg9[%c0_70, %c0_71], %166 {strides = array<i32>} : memref<16x32xf32, #tpu.memory_space<vmem>>, vector<16x32xf32>,
    return
  }
  func.func @transform_0(%arg0: i32) -> (i32, i32) {
    %c0_i32 = arith.constant 0 : i32
    %c0_i32_0 = arith.constant 0 : i32
    return %arg0, %c0_i32 : i32, i32
  }
  func.func @transform_1(%arg0: i32) -> (i32, i32) {
    %c0_i32 = arith.constant 0 : i32
    %c0_i32_0 = arith.constant 0 : i32
    return %arg0, %c0_i32 : i32, i32
  }
  func.func @transform_2(%arg0: i32) -> (i32, i32) {
    %c0_i32 = arith.constant 0 : i32
    %c0_i32_0 = arith.constant 0 : i32
    %c0_i32_1 = arith.constant 0 : i32
    return %c0_i32, %c0_i32_0 : i32, i32
  }
  func.func @transform_3(%arg0: i32) -> (i32, i32) {
    %c0_i32 = arith.constant 0 : i32
    %c0_i32_0 = arith.constant 0 : i32
    %c0_i32_1 = arith.constant 0 : i32
    return %c0_i32, %c0_i32_0 : i32, i32
  }
  func.func @transform_4(%arg0: i32) -> (i32, i32, i32) {
    %c0_i32 = arith.constant 0 : i32
    %c0_i32_0 = arith.constant 0 : i32
    %c0_i32_1 = arith.constant 0 : i32
    %c0_i32_2 = arith.constant 0 : i32
    return %c0_i32, %c0_i32_0, %c0_i32_1 : i32, i32, i32
  }
  func.func @transform_5(%arg0: i32) -> (i32, i32) {
    %c0_i32 = arith.constant 0 : i32
    %c0_i32_0 = arith.constant 0 : i32
    %c0_i32_1 = arith.constant 0 : i32
    return %c0_i32, %c0_i32_0 : i32, i32
  }
  func.func @transform_6(%arg0: i32) -> (i32, i32) {
    %c0_i32 = arith.constant 0 : i32
    %c0_i32_0 = arith.constant 0 : i32
    %c0_i32_1 = arith.constant 0 : i32
    return %c0_i32, %c0_i32_0 : i32, i32
  }
  func.func @transform_7(%arg0: i32) -> (i32, i32) {
    %c0_i32 = arith.constant 0 : i32
    %c0_i32_0 = arith.constant 0 : i32
    %c0_i32_1 = arith.constant 0 : i32
    return %c0_i32, %c0_i32_0 : i32, i32
  }
  func.func @transform_8(%arg0: i32) -> (i32, i32) {
    %c0_i32 = arith.constant 0 : i32
    %c0_i32_0 = arith.constant 0 : i32
    return %arg0, %c0_i32 : i32, i32
  }
}

</mosaic_0001>

<llo_original>
// kernel: _forward_ctx.1
$region0: #{_forward_ctx.1}
  #allocation0 [shape = 'u32[]', space=smem, size = 0x4, offset = 0x4, fixed_abs, tag = 'smem constant byte address 0x4 - core index']
  #allocation1 [shape = 'u32[144,128]{1,0:T(1,128)}', space=vmem, size = 0x12000, scoped, tag = 'internal scratch']
  %s0 = inlined_call_operand.vmem [shape: f32[16,24], index: 0, kind: input, shape index: {}]
  %s1 = inlined_call_operand.vmem [shape: f32[16,8], index: 1, kind: input, shape index: {}]
  %s2 = inlined_call_operand.vmem [shape: bf16[24,128], index: 2, kind: input, shape index: {}]
  %s3 = inlined_call_operand.vmem [shape: bf16[8,128], index: 3, kind: input, shape index: {}]
  %s4 = inlined_call_operand.hbm [shape: bf16[3,128,128], index: 4, kind: input, shape index: {}]
  %s5 = inlined_call_operand.vmem [shape: bf16[128,32], index: 5, kind: input, shape index: {}]
  %s6 = inlined_call_operand.vmem [shape: f32[12,128], index: 6, kind: input, shape index: {}]
  %s7 = inlined_call_operand.vmem [shape: f32[1,32], index: 7, kind: input, shape index: {}]
  %s8 = inlined_call_operand.hbm [shape: f32[16,32], index: 8, kind: output, shape index: {}]
  %s9 = sld [smem:[#allocation0]]
  $region46: #{_forward_ctx.1} parent=0
    _
  %s11 = ssub.s32 1, %s9
  %s12 = scalar_select 0, %s11, %s9
  $region1: #{_forward_ctx.1} parent=0
    #allocation2 [shape = 'u8[98304]{0}', space=vmem, size = 0x18000, scoped, tag = 'input window, operand 4, single buffered']
    #allocation3 [shape = 's32[1]{0}', space=sflag, size = 0x4, scoped, tag = 'scoped memory for _forward_ctx.1']
    #allocation4 [shape = 's32[1]{0}', space=sflag, size = 0x4, scoped, tag = 'scoped memory for _forward_ctx.1']
    #allocation5 [shape = 'u8[8192]{0}', space=vmem, size = 0x2000, scoped, tag = 'output window, operand 0, single buffered']
    %13 = vsyncpa [#allocation3], 0
    %14 = vsyncpa [#allocation4], 0
    // Predicated region
    $region2: #{_forward_ctx.1} parent=1 // pred_check
      _
    $region3: #{_forward_ctx.1} parent=1 // pred_check_branch
      %16 = sbr.rel (0) target = $region5
    $region4: #{_forward_ctx.1} parent=1 // pred_region
      _
    $region5: #{_forward_ctx.1} parent=1 // pred_fallthru
      _
    // Predicated region
    $region6: #{_forward_ctx.1} parent=1 // pred_check
      _
    $region7: #{_forward_ctx.1} parent=1 // pred_check_branch
      %18 = sbr.rel (0) target = $region9
    $region8: #{_forward_ctx.1} parent=1 // pred_region
      _
    $region9: #{_forward_ctx.1} parent=1 // pred_fallthru
      _
    // Predicated region
    $region10: #{_forward_ctx.1} parent=1 // pred_check
      _
    $region11: #{_forward_ctx.1} parent=1 // pred_check_branch
      %20 = sbr.rel (0) target = $region13
    $region12: #{_forward_ctx.1} parent=1 // pred_region
      _
    $region13: #{_forward_ctx.1} parent=1 // pred_fallthru
      _
    // Predicated region
    $region14: #{_forward_ctx.1} parent=1 // pred_check
      _
    $region15: #{_forward_ctx.1} parent=1 // pred_check_branch
      %22 = sbr.rel (0) target = $region17
    $region16: #{_forward_ctx.1} parent=1 // pred_region
      _
    $region17: #{_forward_ctx.1} parent=1 // pred_fallthru
      _
    // Predicated region
    $region18: #{_forward_ctx.1} parent=1 // pred_check
      _
    $region19: #{_forward_ctx.1} parent=1 // pred_check_branch
      %24 = sbr.rel (0) target = $region21
    $region20: #{_forward_ctx.1} parent=1 // pred_region
      %s26 = ssub.s32 3072, 3072
      %27 = vsyncadd [#allocation3], %s26
      %s28 = sshll.u32 [#allocation2], 4
      %s29 = int_to_ptr.vmem [resolvable:$true] %s28
      %34 = dma.hbm_to_vmem [thread:$0]  %s4, 3072, %s29, [#allocation3], 64, 64, 4
    $region21: #{_forward_ctx.1} parent=1 // pred_fallthru
      _
    // Predicated region
    $region22: #{_forward_ctx.1} parent=1 // pred_check
      _
    $region23: #{_forward_ctx.1} parent=1 // pred_check_branch
      %36 = sbr.rel (0) target = $region25
    $region24: #{_forward_ctx.1} parent=1 // pred_region
      _
    $region25: #{_forward_ctx.1} parent=1 // pred_fallthru
      _
    // Predicated region
    $region26: #{_forward_ctx.1} parent=1 // pred_check
      _
    $region27: #{_forward_ctx.1} parent=1 // pred_check_branch
      %38 = sbr.rel (0) target = $region29
    $region28: #{_forward_ctx.1} parent=1 // pred_region
      _
    $region29: #{_forward_ctx.1} parent=1 // pred_fallthru
      _
    // Predicated region
    $region30: #{_forward_ctx.1} parent=1 // pred_check
      _
    $region31: #{_forward_ctx.1} parent=1 // pred_check_branch
      %40 = sbr.rel (0) target = $region33
    $region32: #{_forward_ctx.1} parent=1 // pred_region
      _
    $region33: #{_forward_ctx.1} parent=1 // pred_fallthru
      _
    // Predicated region
    $region34: #{_forward_ctx.1} parent=1 // pred_check
      _
    $region35: #{_forward_ctx.1} parent=1 // pred_check_branch
      %42 = sbr.rel (0) target = $region37
    $region36: #{_forward_ctx.1} parent=1 // pred_region
      %43 = dma.done [#allocation3], 3072
    $region37: #{_forward_ctx.1} parent=1 // pred_fallthru
      _
    %v45 = vld [vmem:[%s0] sm:$0xff]
    %v46 = vld [vmem:[%s0 + $0x8] sm:$0xff]
    %v47 = vpack.c.bf16 %v46, %v45
    %v48 = vld [vmem:[%s2] sm:$0xf]
    %v49 = vld [vmem:[%s2 + $0x4] sm:$0xf]
    %v50 = vld [vmem:[%s2 + $0x8] sm:$0xf]
    %v51 = vld [vmem:[%s1] sm:$0xff]
    %v52 = vld [vmem:[%s1 + $0x8] sm:$0xff]
    %v53 = vpack.c.bf16 %v52, %v51
    %v54 = vld [vmem:[%s3] sm:$0xf]
    %vm55 = vcmask 64512
    %v57 = vsel %vm55, %v53, 0
    %vm59 = vcmask 1043456
    %v61 = vsel %vm59, %v54, 0
    %63 = vmatprep.subr.bf16.mxu0 0
    %64 = vmatpush1.bf16.msra.mxu0 %v61
    %65 = vmatprep.subr.bf16.mxu0 0
    %66 = vmatpush1.bf16.msra.mxu0 0
    %67 = vmatprep.subr.bf16.mxu0 0
    %68 = vmatpush1.bf16.msra.mxu0 0
    %69 = vmatprep.subr.bf16.mxu0 0
    %70 = vmatpush1.bf16.msra.mxu0 0
    %71 = vmatprep.subr.bf16.mxu0 0
    %72 = vmatpush1.bf16.msra.mxu0 0
    %73 = vmatprep.subr.bf16.mxu0 0
    %74 = vmatpush1.bf16.msra.mxu0 0
    %75 = vmatprep.subr.bf16.mxu0 0
    %76 = vmatpush1.bf16.msra.mxu0 0
    %77 = vmatprep.subr.bf16.mxu0 0
    %78 = vmatpush1.bf16.msra.mxu0 0
    %79 = vmatprep.subr.bf16.mxu0 0
    %80 = vmatpush1.bf16.msra.mxu0 0
    %81 = vmatprep.subr.bf16.mxu0 0
    %82 = vmatpush1.bf16.msra.mxu0 0
    %83 = vmatprep.subr.bf16.mxu0 0
    %84 = vmatpush1.bf16.msra.mxu0 0
    %85 = vmatprep.subr.bf16.mxu0 0
    %86 = vmatpush1.bf16.msra.mxu0 0
    %87 = vmatprep.subr.bf16.mxu0 0
    %88 = vmatpush1.bf16.msra.mxu0 0
    %89 = vmatprep.subr.bf16.mxu0 0
    %90 = vmatpush1.bf16.msra.mxu0 0
    %91 = vmatprep.subr.bf16.mxu0 0
    %92 = vmatpush1.bf16.msra.mxu0 0
    %93 = vmatprep.subr.bf16.mxu0 0
    %94 = vmatpush1.bf16.msra.mxu0 0
    %95 = vmatprep.mubr.bf16.mxu0 0
    %96 = vmatmul.mubr.bf16.gmra.mrb[0].mxu0 %v57
    %v97 = vpop.f32.mrb[0].mxu0
    %v98 = vadd.f32 0.0, %v97
    %v99 = vpop.f32.mrb[0].mxu0
    %v100 = vpop.f32.mrb[0].mxu0
    %v101 = vadd.f32 0.0, %v100
    %v102 = vpop.f32.mrb[0].mxu0
    %103 = vdwg.mxu0
    %v107 = vunpack.c.l.b16 %v48
    %v108 = vunpack.c.l.b16 %v49
    %v109 = vunpack.c.l.b16 %v50
    %v110 = vpack.c.b16 %v108, %v107
    %v111 = vpack.c.b16 %v109, %v109
    %vm113 = vcmask 195584
    %v115 = vsel %vm113, %v47, 0
    %v118 = vsel %vm59, %v111, 0
    %120 = vmatprep.subr.bf16.mxu0 0
    %121 = vmatpush1.bf16.msra.mxu0 %v110
    %122 = vmatprep.subr.bf16.mxu0 0
    %123 = vmatpush1.bf16.msra.mxu0 %v118
    %124 = vmatprep.subr.bf16.mxu0 0
    %125 = vmatpush1.bf16.msra.mxu0 0
    %126 = vmatprep.subr.bf16.mxu0 0
    %127 = vmatpush1.bf16.msra.mxu0 0
    %128 = vmatprep.subr.bf16.mxu0 0
    %129 = vmatpush1.bf16.msra.mxu0 0
    %130 = vmatprep.subr.bf16.mxu0 0
    %131 = vmatpush1.bf16.msra.mxu0 0
    %132 = vmatprep.subr.bf16.mxu0 0
    %133 = vmatpush1.bf16.msra.mxu0 0
    %134 = vmatprep.subr.bf16.mxu0 0
    %135 = vmatpush1.bf16.msra.mxu0 0
    %136 = vmatprep.subr.bf16.mxu0 0
    %137 = vmatpush1.bf16.msra.mxu0 0
    %138 = vmatprep.subr.bf16.mxu0 0
    %139 = vmatpush1.bf16.msra.mxu0 0
    %140 = vmatprep.subr.bf16.mxu0 0
    %141 = vmatpush1.bf16.msra.mxu0 0
    %142 = vmatprep.subr.bf16.mxu0 0
    %143 = vmatpush1.bf16.msra.mxu0 0
    %144 = vmatprep.subr.bf16.mxu0 0
    %145 = vmatpush1.bf16.msra.mxu0 0
    %146 = vmatprep.subr.bf16.mxu0 0
    %147 = vmatpush1.bf16.msra.mxu0 0
    %148 = vmatprep.subr.bf16.mxu0 0
    %149 = vmatpush1.bf16.msra.mxu0 0
    %150 = vmatprep.subr.bf16.mxu0 0
    %151 = vmatpush1.bf16.msra.mxu0 0
    %152 = vmatprep.mubr.bf16.mxu0 0
    %153 = vmatmul.mubr.bf16.gmra.mrb[0].mxu0 %v115
    %v154 = vpop.f32.mrb[0].mxu0
    %v155 = vadd.f32 %v98, %v154
    %v156 = vpop.f32.mrb[0].mxu0
    %v157 = vpop.f32.mrb[0].mxu0
    %v158 = vadd.f32 %v101, %v157
    %v159 = vpop.f32.mrb[0].mxu0
    %160 = vdwg.mxu0
    %v161 = vld [vmem:[%s6] sm:$0x1]
    %v162 = vlaneseq
    %v163 = vshrl.u32 %v162, 7
    %v164 = vsub.s32 0, %v163
    %v165 = vrot.slane %v161, %v164
    %v166 = vadd.f32 %v155, %v165
    %v167 = vadd.f32 %v158, %v165
    %v168 = vld [vmem:[%s6 + $0x4] sm:$0x1]
    %v169 = vld [vmem:[%s6 + $0x8] sm:$0x1]
    %170 = vadd.xlane.f32.xlu0 %v166
    %v171 = vpop.xlane.xlu0 %170
    %172 = vadd.xlane.f32.xlu0 %v167
    %v173 = vpop.xlane.xlu0 %172
    %v174 = vrcp.pop 128.0
    %v175 = vmul.f32 %v171, %v174
    %v176 = vmul.f32 %v173, %v174
    %v177 = vmul.f32 %v166, %v166
    %v178 = vmul.f32 %v167, %v167
    %179 = vadd.xlane.f32.xlu0 %v177
    %v180 = vpop.xlane.xlu0 %179
    %181 = vadd.xlane.f32.xlu0 %v178
    %v182 = vpop.xlane.xlu0 %181
    %v183 = vmul.f32 %v180, %v174
    %v184 = vmul.f32 %v182, %v174
    %v185 = vmul.f32 %v175, %v175
    %v186 = vmul.f32 %v176, %v176
    %v187 = vsub.f32 %v183, %v185
    %v188 = vsub.f32 %v184, %v186
    %v189 = vsub.f32 %v166, %v175
    %v190 = vsub.f32 %v167, %v176
    %v191 = vadd.f32 %v187, 1e-05
    %v192 = vadd.f32 %v188, 1e-05
    %v193 = vrsqrt.pop %v191
    %v194 = vrsqrt.pop %v192
    %v195 = vmul.f32 %v189, %v193
    %v196 = vmul.f32 %v190, %v194
    %v197 = vlaneseq
    %v198 = vshrl.u32 %v197, 7
    %v199 = vsub.s32 0, %v198
    %v200 = vrot.slane %v168, %v199
    %v201 = vmul.f32 %v195, %v200
    %v202 = vmul.f32 %v196, %v200
    %v203 = vlaneseq
    %v204 = vshrl.u32 %v203, 7
    %v205 = vsub.s32 0, %v204
    %v206 = vrot.slane %v169, %v205
    %v207 = vadd.f32 %v201, %v206
    %v208 = vadd.f32 %v202, %v206
    %v209 = vmul.f32 %v207, 0.5
    %v210 = vmul.f32 %v208, 0.5
    %v211 = vmul.f32 %v207, 0.70710677
    %v212 = vmul.f32 %v208, 0.70710677
    %v213 = verf.f32.pop %v211
    %v214 = verf.f32.pop %v212
    %v215 = vadd.f32 %v213, 1.0
    %v216 = vadd.f32 %v214, 1.0
    %v217 = vmul.f32 %v209, %v215
    %v218 = vmul.f32 %v210, %v216
    %v219 = vpack.c.bf16 %v218, %v217
    %v220 = vld [vmem:[#allocation2] sm:$0xf]
    %v221 = vld [vmem:[#allocation2 + $0x4] sm:$0xf]
    %v222 = vld [vmem:[#allocation2 + $0x8] sm:$0xf]
    %v223 = vld [vmem:[#allocation2 + $0xc] sm:$0xf]
    %v224 = vld [vmem:[#allocation2 + $0x10] sm:$0xf]
    %v225 = vld [vmem:[#allocation2 + $0x14] sm:$0xf]
    %v226 = vld [vmem:[#allocation2 + $0x18] sm:$0xf]
    %v227 = vld [vmem:[#allocation2 + $0x1c] sm:$0xf]
    %v228 = vld [vmem:[#allocation2 + $0x20] sm:$0xf]
    %v229 = vld [vmem:[#allocation2 + $0x24] sm:$0xf]
    %v230 = vld [vmem:[#allocation2 + $0x28] sm:$0xf]
    %v231 = vld [vmem:[#allocation2 + $0x2c] sm:$0xf]
    %v232 = vld [vmem:[#allocation2 + $0x30] sm:$0xf]
    %v233 = vld [vmem:[#allocation2 + $0x34] sm:$0xf]
    %v234 = vld [vmem:[#allocation2 + $0x38] sm:$0xf]
    %v235 = vld [vmem:[#allocation2 + $0x3c] sm:$0xf]
    %v236 = vld [vmem:[%s6 + $0x1] sm:$0x1]
    %v237 = vlaneseq
    %v238 = vshrl.u32 %v237, 7
    %v239 = vsub.s32 0, %v238
    %v240 = vrot.slane %v236, %v239
    %v257 = vunpack.c.l.b16 %v220
    %v258 = vunpack.c.l.b16 %v221
    %v259 = vunpack.c.l.b16 %v222
    %v260 = vunpack.c.l.b16 %v223
    %v261 = vunpack.c.l.b16 %v224
    %v262 = vunpack.c.l.b16 %v225
    %v263 = vunpack.c.l.b16 %v226
    %v264 = vunpack.c.l.b16 %v227
    %v265 = vunpack.c.l.b16 %v228
    %v266 = vunpack.c.l.b16 %v229
    %v267 = vunpack.c.l.b16 %v230
    %v268 = vunpack.c.l.b16 %v231
    %v269 = vunpack.c.l.b16 %v232
    %v270 = vunpack.c.l.b16 %v233
    %v271 = vunpack.c.l.b16 %v234
    %v272 = vunpack.c.l.b16 %v235
    %v273 = vpack.c.b16 %v258, %v257
    %v274 = vpack.c.b16 %v260, %v259
    %v275 = vpack.c.b16 %v262, %v261
    %v276 = vpack.c.b16 %v264, %v263
    %v277 = vpack.c.b16 %v266, %v265
    %v278 = vpack.c.b16 %v268, %v267
    %v279 = vpack.c.b16 %v270, %v269
    %v280 = vpack.c.b16 %v272, %v271
    %289 = vmatprep.subr.bf16.mxu0 0
    %290 = vmatpush1.bf16.msra.mxu0 %v273
    %291 = vmatprep.subr.bf16.mxu0 0
    %292 = vmatpush1.bf16.msra.mxu0 %v274
    %293 = vmatprep.subr.bf16.mxu0 0
    %294 = vmatpush1.bf16.msra.mxu0 %v275
    %295 = vmatprep.subr.bf16.mxu0 0
    %296 = vmatpush1.bf16.msra.mxu0 %v276
    %297 = vmatprep.subr.bf16.mxu0 0
    %298 = vmatpush1.bf16.msra.mxu0 %v277
    %299 = vmatprep.subr.bf16.mxu0 0
    %300 = vmatpush1.bf16.msra.mxu0 %v278
    %301 = vmatprep.subr.bf16.mxu0 0
    %302 = vmatpush1.bf16.msra.mxu0 %v279
    %303 = vmatprep.subr.bf16.mxu0 0
    %304 = vmatpush1.bf16.msra.mxu0 %v280
    %305 = vmatprep.subr.bf16.mxu0 0
    %306 = vmatpush1.bf16.msra.mxu0 0
    %307 = vmatprep.subr.bf16.mxu0 0
    %308 = vmatpush1.bf16.msra.mxu0 0
    %309 = vmatprep.subr.bf16.mxu0 0
    %310 = vmatpush1.bf16.msra.mxu0 0
    %311 = vmatprep.subr.bf16.mxu0 0
    %312 = vmatpush1.bf16.msra.mxu0 0
    %313 = vmatprep.subr.bf16.mxu0 0
    %314 = vmatpush1.bf16.msra.mxu0 0
    %315 = vmatprep.subr.bf16.mxu0 0
    %316 = vmatpush1.bf16.msra.mxu0 0
    %317 = vmatprep.subr.bf16.mxu0 0
    %318 = vmatpush1.bf16.msra.mxu0 0
    %319 = vmatprep.subr.bf16.mxu0 0
    %320 = vmatpush1.bf16.msra.mxu0 0
    %321 = vmatprep.mubr.bf16.mxu0 0
    %322 = vmatmul.mubr.bf16.gmra.mrb[0].mxu0 %v219
    %v323 = vpop.f32.mrb[0].mxu0
    %v324 = vadd.f32 %v240, %v323
    %v325 = vpop.f32.mrb[0].mxu0
    %v326 = vpop.f32.mrb[0].mxu0
    %v327 = vadd.f32 %v240, %v326
    %v328 = vpop.f32.mrb[0].mxu0
    %329 = vdwg.mxu0
    %v330 = vld [vmem:[%s6 + $0x5] sm:$0x1]
    %v331 = vld [vmem:[%s6 + $0x9] sm:$0x1]
    %332 = vadd.xlane.f32.xlu0 %v324
    %v333 = vpop.xlane.xlu0 %332
    %334 = vadd.xlane.f32.xlu0 %v327
    %v335 = vpop.xlane.xlu0 %334
    %v336 = vmul.f32 %v333, %v174
    %v337 = vmul.f32 %v335, %v174
    %v338 = vmul.f32 %v324, %v324
    %v339 = vmul.f32 %v327, %v327
    %340 = vadd.xlane.f32.xlu0 %v338
    %v341 = vpop.xlane.xlu0 %340
    %342 = vadd.xlane.f32.xlu0 %v339
    %v343 = vpop.xlane.xlu0 %342
    %v344 = vmul.f32 %v341, %v174
    %v345 = vmul.f32 %v343, %v174
    %v346 = vmul.f32 %v336, %v336
    %v347 = vmul.f32 %v337, %v337
    %v348 = vsub.f32 %v344, %v346
    %v349 = vsub.f32 %v345, %v347
    %v350 = vsub.f32 %v324, %v336
    %v351 = vsub.f32 %v327, %v337
    %v352 = vadd.f32 %v348, 1e-05
    %v353 = vadd.f32 %v349, 1e-05
    %v354 = vrsqrt.pop %v352
    %v355 = vrsqrt.pop %v353
    %v356 = vmul.f32 %v350, %v354
    %v357 = vmul.f32 %v351, %v355
    %v358 = vlaneseq
    %v359 = vshrl.u32 %v358, 7
    %v360 = vsub.s32 0, %v359
    %v361 = vrot.slane %v330, %v360
    %v362 = vmul.f32 %v356, %v361
    %v363 = vmul.f32 %v357, %v361
    %v364 = vlaneseq
    %v365 = vshrl.u32 %v364, 7
    %v366 = vsub.s32 0, %v365
    %v367 = vrot.slane %v331, %v366
    %v368 = vadd.f32 %v362, %v367
    %v369 = vadd.f32 %v363, %v367
    %v370 = vmul.f32 %v368, 0.5
    %v371 = vmul.f32 %v369, 0.5
    %v372 = vmul.f32 %v368, 0.70710677
    %v373 = vmul.f32 %v369, 0.70710677
    %v374 = verf.f32.pop %v372
    %v375 = verf.f32.pop %v373
    %v376 = vadd.f32 %v374, 1.0
    %v377 = vadd.f32 %v375, 1.0
    %v378 = vmul.f32 %v370, %v376
    %v379 = vmul.f32 %v371, %v377
    %v380 = vpack.c.bf16 %v379, %v378
    %s381 = scalar_lea.vmem [#allocation2], 64
    %v382 = vld [vmem:[%s381] sm:$0xf]
    %v383 = vld [vmem:[%s381 + $0x4] sm:$0xf]
    %v384 = vld [vmem:[%s381 + $0x8] sm:$0xf]
    %v385 = vld [vmem:[%s381 + $0xc] sm:$0xf]
    %v386 = vld [vmem:[%s381 + $0x10] sm:$0xf]
    %v387 = vld [vmem:[%s381 + $0x14] sm:$0xf]
    %v388 = vld [vmem:[%s381 + $0x18] sm:$0xf]
    %v389 = vld [vmem:[%s381 + $0x1c] sm:$0xf]
    %v390 = vld [vmem:[%s381 + $0x20] sm:$0xf]
    %v391 = vld [vmem:[%s381 + $0x24] sm:$0xf]
    %v392 = vld [vmem:[%s381 + $0x28] sm:$0xf]
    %v393 = vld [vmem:[%s381 + $0x2c] sm:$0xf]
    %v394 = vld [vmem:[%s381 + $0x30] sm:$0xf]
    %v395 = vld [vmem:[%s381 + $0x34] sm:$0xf]
    %v396 = vld [vmem:[%s381 + $0x38] sm:$0xf]
    %v397 = vld [vmem:[%s381 + $0x3c] sm:$0xf]
    %v398 = vld [vmem:[%s6 + $0x2] sm:$0x1]
    %v399 = vlaneseq
    %v400 = vshrl.u32 %v399, 7
    %v401 = vsub.s32 0, %v400
    %v402 = vrot.slane %v398, %v401
    %v419 = vunpack.c.l.b16 %v382
    %v420 = vunpack.c.l.b16 %v383
    %v421 = vunpack.c.l.b16 %v384
    %v422 = vunpack.c.l.b16 %v385
    %v423 = vunpack.c.l.b16 %v386
    %v424 = vunpack.c.l.b16 %v387
    %v425 = vunpack.c.l.b16 %v388
    %v426 = vunpack.c.l.b16 %v389
    %v427 = vunpack.c.l.b16 %v390
    %v428 = vunpack.c.l.b16 %v391
    %v429 = vunpack.c.l.b16 %v392
    %v430 = vunpack.c.l.b16 %v393
    %v431 = vunpack.c.l.b16 %v394
    %v432 = vunpack.c.l.b16 %v395
    %v433 = vunpack.c.l.b16 %v396
    %v434 = vunpack.c.l.b16 %v397
    %v435 = vpack.c.b16 %v420, %v419
    %v436 = vpack.c.b16 %v422, %v421
    %v437 = vpack.c.b16 %v424, %v423
    %v438 = vpack.c.b16 %v426, %v425
    %v439 = vpack.c.b16 %v428, %v427
    %v440 = vpack.c.b16 %v430, %v429
    %v441 = vpack.c.b16 %v432, %v431
    %v442 = vpack.c.b16 %v434, %v433
    %451 = vmatprep.subr.bf16.mxu0 0
    %452 = vmatpush1.bf16.msra.mxu0 %v435
    %453 = vmatprep.subr.bf16.mxu0 0
    %454 = vmatpush1.bf16.msra.mxu0 %v436
    %455 = vmatprep.subr.bf16.mxu0 0
    %456 = vmatpush1.bf16.msra.mxu0 %v437
    %457 = vmatprep.subr.bf16.mxu0 0
    %458 = vmatpush1.bf16.msra.mxu0 %v438
    %459 = vmatprep.subr.bf16.mxu0 0
    %460 = vmatpush1.bf16.msra.mxu0 %v439
    %461 = vmatprep.subr.bf16.mxu0 0
    %462 = vmatpush1.bf16.msra.mxu0 %v440
    %463 = vmatprep.subr.bf16.mxu0 0
    %464 = vmatpush1.bf16.msra.mxu0 %v441
    %465 = vmatprep.subr.bf16.mxu0 0
    %466 = vmatpush1.bf16.msra.mxu0 %v442
    %467 = vmatprep.subr.bf16.mxu0 0
    %468 = vmatpush1.bf16.msra.mxu0 0
    %469 = vmatprep.subr.bf16.mxu0 0
    %470 = vmatpush1.bf16.msra.mxu0 0
    %471 = vmatprep.subr.bf16.mxu0 0
    %472 = vmatpush1.bf16.msra.mxu0 0
    %473 = vmatprep.subr.bf16.mxu0 0
    %474 = vmatpush1.bf16.msra.mxu0 0
    %475 = vmatprep.subr.bf16.mxu0 0
    %476 = vmatpush1.bf16.msra.mxu0 0
    %477 = vmatprep.subr.bf16.mxu0 0
    %478 = vmatpush1.bf16.msra.mxu0 0
    %479 = vmatprep.subr.bf16.mxu0 0
    %480 = vmatpush1.bf16.msra.mxu0 0
    %481 = vmatprep.subr.bf16.mxu0 0
    %482 = vmatpush1.bf16.msra.mxu0 0
    %483 = vmatprep.mubr.bf16.mxu0 0
    %484 = vmatmul.mubr.bf16.gmra.mrb[0].mxu0 %v380
    %v485 = vpop.f32.mrb[0].mxu0
    %v486 = vadd.f32 %v402, %v485
    %v487 = vpop.f32.mrb[0].mxu0
    %v488 = vpop.f32.mrb[0].mxu0
    %v489 = vadd.f32 %v402, %v488
    %v490 = vpop.f32.mrb[0].mxu0
    %491 = vdwg.mxu0
    %v492 = vld [vmem:[%s6 + $0x6] sm:$0x1]
    %v493 = vld [vmem:[%s6 + $0xa] sm:$0x1]
    %494 = vadd.xlane.f32.xlu0 %v486
    %v495 = vpop.xlane.xlu0 %494
    %496 = vadd.xlane.f32.xlu0 %v489
    %v497 = vpop.xlane.xlu0 %496
    %v498 = vmul.f32 %v495, %v174
    %v499 = vmul.f32 %v497, %v174
    %v500 = vmul.f32 %v486, %v486
    %v501 = vmul.f32 %v489, %v489
    %502 = vadd.xlane.f32.xlu0 %v500
    %v503 = vpop.xlane.xlu0 %502
    %504 = vadd.xlane.f32.xlu0 %v501
    %v505 = vpop.xlane.xlu0 %504
    %v506 = vmul.f32 %v503, %v174
    %v507 = vmul.f32 %v505, %v174
    %v508 = vmul.f32 %v498, %v498
    %v509 = vmul.f32 %v499, %v499
    %v510 = vsub.f32 %v506, %v508
    %v511 = vsub.f32 %v507, %v509
    %v512 = vsub.f32 %v486, %v498
    %v513 = vsub.f32 %v489, %v499
    %v514 = vadd.f32 %v510, 1e-05
    %v515 = vadd.f32 %v511, 1e-05
    %v516 = vrsqrt.pop %v514
    %v517 = vrsqrt.pop %v515
    %v518 = vmul.f32 %v512, %v516
    %v519 = vmul.f32 %v513, %v517
    %v520 = vlaneseq
    %v521 = vshrl.u32 %v520, 7
    %v522 = vsub.s32 0, %v521
    %v523 = vrot.slane %v492, %v522
    %v524 = vmul.f32 %v518, %v523
    %v525 = vmul.f32 %v519, %v523
    %v526 = vlaneseq
    %v527 = vshrl.u32 %v526, 7
    %v528 = vsub.s32 0, %v527
    %v529 = vrot.slane %v493, %v528
    %v530 = vadd.f32 %v524, %v529
    %v531 = vadd.f32 %v525, %v529
    %v532 = vmul.f32 %v530, 0.5
    %v533 = vmul.f32 %v531, 0.5
    %v534 = vmul.f32 %v530, 0.70710677
    %v535 = vmul.f32 %v531, 0.70710677
    %v536 = verf.f32.pop %v534
    %v537 = verf.f32.pop %v535
    %v538 = vadd.f32 %v536, 1.0
    %v539 = vadd.f32 %v537, 1.0
    %v540 = vmul.f32 %v532, %v538
    %v541 = vmul.f32 %v533, %v539
    %v542 = vpack.c.bf16 %v541, %v540
    %s543 = scalar_lea.vmem [#allocation2], 128
    %v544 = vld [vmem:[%s543] sm:$0xf]
    %v545 = vld [vmem:[%s543 + $0x4] sm:$0xf]
    %v546 = vld [vmem:[%s543 + $0x8] sm:$0xf]
    %v547 = vld [vmem:[%s543 + $0xc] sm:$0xf]
    %v548 = vld [vmem:[%s543 + $0x10] sm:$0xf]
    %v549 = vld [vmem:[%s543 + $0x14] sm:$0xf]
    %v550 = vld [vmem:[%s543 + $0x18] sm:$0xf]
    %v551 = vld [vmem:[%s543 + $0x1c] sm:$0xf]
    %v552 = vld [vmem:[%s543 + $0x20] sm:$0xf]
    %v553 = vld [vmem:[%s543 + $0x24] sm:$0xf]
    %v554 = vld [vmem:[%s543 + $0x28] sm:$0xf]
    %v555 = vld [vmem:[%s543 + $0x2c] sm:$0xf]
    %v556 = vld [vmem:[%s543 + $0x30] sm:$0xf]
    %v557 = vld [vmem:[%s543 + $0x34] sm:$0xf]
    %v558 = vld [vmem:[%s543 + $0x38] sm:$0xf]
    %v559 = vld [vmem:[%s543 + $0x3c] sm:$0xf]
    %v560 = vld [vmem:[%s6 + $0x3] sm:$0x1]
    %v561 = vlaneseq
    %v562 = vshrl.u32 %v561, 7
    %v563 = vsub.s32 0, %v562
    %v564 = vrot.slane %v560, %v563
    %v581 = vunpack.c.l.b16 %v544
    %v582 = vunpack.c.l.b16 %v545
    %v583 = vunpack.c.l.b16 %v546
    %v584 = vunpack.c.l.b16 %v547
    %v585 = vunpack.c.l.b16 %v548
    %v586 = vunpack.c.l.b16 %v549
    %v587 = vunpack.c.l.b16 %v550
    %v588 = vunpack.c.l.b16 %v551
    %v589 = vunpack.c.l.b16 %v552
    %v590 = vunpack.c.l.b16 %v553
    %v591 = vunpack.c.l.b16 %v554
    %v592 = vunpack.c.l.b16 %v555
    %v593 = vunpack.c.l.b16 %v556
    %v594 = vunpack.c.l.b16 %v557
    %v595 = vunpack.c.l.b16 %v558
    %v596 = vunpack.c.l.b16 %v559
    %v597 = vpack.c.b16 %v582, %v581
    %v598 = vpack.c.b16 %v584, %v583
    %v599 = vpack.c.b16 %v586, %v585
    %v600 = vpack.c.b16 %v588, %v587
    %v601 = vpack.c.b16 %v590, %v589
    %v602 = vpack.c.b16 %v592, %v591
    %v603 = vpack.c.b16 %v594, %v593
    %v604 = vpack.c.b16 %v596, %v595
    %613 = vmatprep.subr.bf16.mxu0 0
    %614 = vmatpush1.bf16.msra.mxu0 %v597
    %615 = vmatprep.subr.bf16.mxu0 0
    %616 = vmatpush1.bf16.msra.mxu0 %v598
    %617 = vmatprep.subr.bf16.mxu0 0
    %618 = vmatpush1.bf16.msra.mxu0 %v599
    %619 = vmatprep.subr.bf16.mxu0 0
    %620 = vmatpush1.bf16.msra.mxu0 %v600
    %621 = vmatprep.subr.bf16.mxu0 0
    %622 = vmatpush1.bf16.msra.mxu0 %v601
    %623 = vmatprep.subr.bf16.mxu0 0
    %624 = vmatpush1.bf16.msra.mxu0 %v602
    %625 = vmatprep.subr.bf16.mxu0 0
    %626 = vmatpush1.bf16.msra.mxu0 %v603
    %627 = vmatprep.subr.bf16.mxu0 0
    %628 = vmatpush1.bf16.msra.mxu0 %v604
    %629 = vmatprep.subr.bf16.mxu0 0
    %630 = vmatpush1.bf16.msra.mxu0 0
    %631 = vmatprep.subr.bf16.mxu0 0
    %632 = vmatpush1.bf16.msra.mxu0 0
    %633 = vmatprep.subr.bf16.mxu0 0
    %634 = vmatpush1.bf16.msra.mxu0 0
    %635 = vmatprep.subr.bf16.mxu0 0
    %636 = vmatpush1.bf16.msra.mxu0 0
    %637 = vmatprep.subr.bf16.mxu0 0
    %638 = vmatpush1.bf16.msra.mxu0 0
    %639 = vmatprep.subr.bf16.mxu0 0
    %640 = vmatpush1.bf16.msra.mxu0 0
    %641 = vmatprep.subr.bf16.mxu0 0
    %642 = vmatpush1.bf16.msra.mxu0 0
    %643 = vmatprep.subr.bf16.mxu0 0
    %644 = vmatpush1.bf16.msra.mxu0 0
    %645 = vmatprep.mubr.bf16.mxu0 0
    %646 = vmatmul.mubr.bf16.gmra.mrb[0].mxu0 %v542
    %v647 = vpop.f32.mrb[0].mxu0
    %v648 = vadd.f32 %v564, %v647
    %v649 = vpop.f32.mrb[0].mxu0
    %v650 = vpop.f32.mrb[0].mxu0
    %v651 = vadd.f32 %v564, %v650
    %v652 = vpop.f32.mrb[0].mxu0
    %653 = vdwg.mxu0
    %v654 = vld [vmem:[%s6 + $0x7] sm:$0x1]
    %v655 = vld [vmem:[%s6 + $0xb] sm:$0x1]
    %656 = vadd.xlane.f32.xlu0 %v648
    %v657 = vpop.xlane.xlu0 %656
    %658 = vadd.xlane.f32.xlu0 %v651
    %v659 = vpop.xlane.xlu0 %658
    %v660 = vmul.f32 %v657, %v174
    %v661 = vmul.f32 %v659, %v174
    %v662 = vmul.f32 %v648, %v648
    %v663 = vmul.f32 %v651, %v651
    %664 = vadd.xlane.f32.xlu0 %v662
    %v665 = vpop.xlane.xlu0 %664
    %666 = vadd.xlane.f32.xlu0 %v663
    %v667 = vpop.xlane.xlu0 %666
    %v668 = vmul.f32 %v665, %v174
    %v669 = vmul.f32 %v667, %v174
    %v670 = vmul.f32 %v660, %v660
    %v671 = vmul.f32 %v661, %v661
    %v672 = vsub.f32 %v668, %v670
    %v673 = vsub.f32 %v669, %v671
    %v674 = vsub.f32 %v648, %v660
    %v675 = vsub.f32 %v651, %v661
    %v676 = vadd.f32 %v672, 1e-05
    %v677 = vadd.f32 %v673, 1e-05
    %v678 = vrsqrt.pop %v676
    %v679 = vrsqrt.pop %v677
    %v680 = vmul.f32 %v674, %v678
    %v681 = vmul.f32 %v675, %v679
    %v682 = vlaneseq
    %v683 = vshrl.u32 %v682, 7
    %v684 = vsub.s32 0, %v683
    %v685 = vrot.slane %v654, %v684
    %v686 = vmul.f32 %v680, %v685
    %v687 = vmul.f32 %v681, %v685
    %v688 = vlaneseq
    %v689 = vshrl.u32 %v688, 7
    %v690 = vsub.s32 0, %v689
    %v691 = vrot.slane %v655, %v690
    %v692 = vadd.f32 %v686, %v691
    %v693 = vadd.f32 %v687, %v691
    %v694 = vmul.f32 %v692, 0.5
    %v695 = vmul.f32 %v693, 0.5
    %v696 = vmul.f32 %v692, 0.70710677
    %v697 = vmul.f32 %v693, 0.70710677
    %v698 = verf.f32.pop %v696
    %v699 = verf.f32.pop %v697
    %v700 = vadd.f32 %v698, 1.0
    %v701 = vadd.f32 %v699, 1.0
    %v702 = vmul.f32 %v694, %v700
    %v703 = vmul.f32 %v695, %v701
    %v704 = vpack.c.bf16 %v703, %v702
    %v705 = vld [vmem:[%s5] sm:$0xf]
    %v706 = vld [vmem:[%s5 + $0x4] sm:$0xf]
    %v707 = vld [vmem:[%s5 + $0x8] sm:$0xf]
    %v708 = vld [vmem:[%s5 + $0xc] sm:$0xf]
    %v709 = vld [vmem:[%s5 + $0x10] sm:$0xf]
    %v710 = vld [vmem:[%s5 + $0x14] sm:$0xf]
    %v711 = vld [vmem:[%s5 + $0x18] sm:$0xf]
    %v712 = vld [vmem:[%s5 + $0x1c] sm:$0xf]
    %v713 = vld [vmem:[%s5 + $0x20] sm:$0xf]
    %v714 = vld [vmem:[%s5 + $0x24] sm:$0xf]
    %v715 = vld [vmem:[%s5 + $0x28] sm:$0xf]
    %v716 = vld [vmem:[%s5 + $0x2c] sm:$0xf]
    %v717 = vld [vmem:[%s5 + $0x30] sm:$0xf]
    %v718 = vld [vmem:[%s5 + $0x34] sm:$0xf]
    %v719 = vld [vmem:[%s5 + $0x38] sm:$0xf]
    %v720 = vld [vmem:[%s5 + $0x3c] sm:$0xf]
    %v721 = vld [vmem:[%s7] sm:$0x1]
    %v723 = vlaneseq
    %v724 = vshrl.u32 %v723, 7
    %v725 = vsub.s32 0, %v724
    %v726 = vrot.slane %v721, %v725
    %v744 = vunpack.c.l.b16 %v705
    %v745 = vunpack.c.l.b16 %v706
    %v746 = vunpack.c.l.b16 %v707
    %v747 = vunpack.c.l.b16 %v708
    %v748 = vunpack.c.l.b16 %v709
    %v749 = vunpack.c.l.b16 %v710
    %v750 = vunpack.c.l.b16 %v711
    %v751 = vunpack.c.l.b16 %v712
    %v752 = vunpack.c.l.b16 %v713
    %v753 = vunpack.c.l.b16 %v714
    %v754 = vunpack.c.l.b16 %v715
    %v755 = vunpack.c.l.b16 %v716
    %v756 = vunpack.c.l.b16 %v717
    %v757 = vunpack.c.l.b16 %v718
    %v758 = vunpack.c.l.b16 %v719
    %v759 = vunpack.c.l.b16 %v720
    %v760 = vpack.c.b16 %v745, %v744
    %v761 = vpack.c.b16 %v747, %v746
    %v762 = vpack.c.b16 %v749, %v748
    %v763 = vpack.c.b16 %v751, %v750
    %v764 = vpack.c.b16 %v753, %v752
    %v765 = vpack.c.b16 %v755, %v754
    %v766 = vpack.c.b16 %v757, %v756
    %v767 = vpack.c.b16 %v759, %v758
    %776 = vmatprep.subr.bf16.mxu0 0
    %777 = vmatpush1.bf16.msra.mxu0 %v760
    %778 = vmatprep.subr.bf16.mxu0 0
    %779 = vmatpush1.bf16.msra.mxu0 %v761
    %780 = vmatprep.subr.bf16.mxu0 0
    %781 = vmatpush1.bf16.msra.mxu0 %v762
    %782 = vmatprep.subr.bf16.mxu0 0
    %783 = vmatpush1.bf16.msra.mxu0 %v763
    %784 = vmatprep.subr.bf16.mxu0 0
    %785 = vmatpush1.bf16.msra.mxu0 %v764
    %786 = vmatprep.subr.bf16.mxu0 0
    %787 = vmatpush1.bf16.msra.mxu0 %v765
    %788 = vmatprep.subr.bf16.mxu0 0
    %789 = vmatpush1.bf16.msra.mxu0 %v766
    %790 = vmatprep.subr.bf16.mxu0 0
    %791 = vmatpush1.bf16.msra.mxu0 %v767
    %792 = vmatprep.subr.bf16.mxu0 0
    %793 = vmatpush1.bf16.msra.mxu0 0
    %794 = vmatprep.subr.bf16.mxu0 0
    %795 = vmatpush1.bf16.msra.mxu0 0
    %796 = vmatprep.subr.bf16.mxu0 0
    %797 = vmatpush1.bf16.msra.mxu0 0
    %798 = vmatprep.subr.bf16.mxu0 0
    %799 = vmatpush1.bf16.msra.mxu0 0
    %800 = vmatprep.subr.bf16.mxu0 0
    %801 = vmatpush1.bf16.msra.mxu0 0
    %802 = vmatprep.subr.bf16.mxu0 0
    %803 = vmatpush1.bf16.msra.mxu0 0
    %804 = vmatprep.subr.bf16.mxu0 0
    %805 = vmatpush1.bf16.msra.mxu0 0
    %806 = vmatprep.subr.bf16.mxu0 0
    %807 = vmatpush1.bf16.msra.mxu0 0
    %808 = vmatprep.mubr.bf16.mxu0 0
    %809 = vmatmul.mubr.bf16.gmra.mrb[0].mxu0 %v704
    %v810 = vpop.f32.mrb[0].mxu0
    %v811 = vadd.f32 %v726, %v810
    %v812 = vpop.f32.mrb[0].mxu0
    %v813 = vpop.f32.mrb[0].mxu0
    %v814 = vadd.f32 %v726, %v813
    %v815 = vpop.f32.mrb[0].mxu0
    %816 = vdwg.mxu0
    %vm817 = vcmask 261120
    %818 = vst.msk [vmem:[#allocation5] sm:$0xff] %vm817, %v811
    %819 = vst.msk [vmem:[#allocation5 + $0x8] sm:$0xff] %vm817, %v814
    // Predicated region
    $region38: #{_forward_ctx.1} parent=1 // pred_check
      _
    $region39: #{_forward_ctx.1} parent=1 // pred_check_branch
      %821 = sbr.rel (0) target = $region41
    $region40: #{_forward_ctx.1} parent=1 // pred_region
      %s823 = ssub.s32 256, 256
      %824 = vsyncadd [#allocation4], %s823
      %s825 = sshll.u32 [#allocation5], 4
      %s826 = int_to_ptr.vmem [resolvable:$true] %s825
      %831 = dma.vmem_to_hbm [thread:$0]  %s826, 256, %s8, [#allocation4], 128, 128, 8
    $region41: #{_forward_ctx.1} parent=1 // pred_fallthru
      _
    // Predicated region
    $region42: #{_forward_ctx.1} parent=1 // pred_check
      _
    $region43: #{_forward_ctx.1} parent=1 // pred_check_branch
      %833 = sbr.rel (0) target = $region45
    $region44: #{_forward_ctx.1} parent=1 // pred_region
      %834 = dma.done [#allocation4], 256
    $region45: #{_forward_ctx.1} parent=1 // pred_fallthru
      _
    %835 = vsyncpa [#allocation3], 1
    %836 = vsyncpa [#allocation4], 1

</llo_original>
